<compile_context>
chip_gen: v6e
topology: v6e:2x2x1
jax: 0.10.0
libtpu: 0.0.40
codegen_flags: <defaults>
</compile_context>

<pallas_src>
import functools

import jax
import jax.numpy as jnp
from jax.experimental import pallas as pl
from jax.experimental.pallas import tpu as pltpu

_EPS = 1e-6  # torch F.pairwise_distance default eps


def _contrast_loss_kernel(e1_ref, e2_ref, label_ref, out_ref, *,
                          margin, tb, b_valid, mask_rows):
    i = pl.program_id(0)

    e1 = e1_ref[...].astype(jnp.float32)          # (TB, D)
    e2 = e2_ref[...].astype(jnp.float32)          # (TB, D)
    y = label_ref[0].astype(jnp.float32)          # (1, TB)  lane-dense labels

    diff = e1 - e2 + jnp.float32(_EPS)            # torch adds eps to the diff
    sq = jnp.sum(diff * diff, axis=-1, keepdims=True)   # (TB, 1) = d^2
    d = jnp.sqrt(sq)                                     # EUP slot (hinge only)
    hinge = jnp.maximum(jnp.float32(margin) - d, 0.0)
    term = hinge * hinge - sq                            # y-weighted part

    if mask_rows:
        # Edge tile: rows >= b_valid hold undefined VMEM data (possibly
        # NaN/Inf).  Must be a select, not a multiply-by-mask.
        row = jax.lax.broadcasted_iota(jnp.int32, sq.shape, 0) + i * tb
        valid = row < b_valid
        sq = jnp.where(valid, sq, 0.0)
        term = jnp.where(valid, term, 0.0)

    # sum_i loss_i = sum_i sq_i + sum_i y_i * (hinge_i^2 - sq_i)
    # y is (1, TB) lane-major, term is (TB, 1) sublane-major: combine them with
    # a tiny MXU dot instead of a lane<->sublane relayout.
    s = jnp.sum(sq) + jnp.sum(jnp.dot(y, term, preferred_element_type=jnp.float32))

    # Write the tile's partial sum into element [0, 0] of a lane-dense (8, 128)
    # output block (unmasked full-block store); final reduction happens in JAX.
    ri = jax.lax.broadcasted_iota(jnp.int32, out_ref.shape, 0)
    ci = jax.lax.broadcasted_iota(jnp.int32, out_ref.shape, 1)
    out_ref[...] = jnp.where((ri == 0) & (ci == 0), s, 0.0)


def contrast_loss(embedding1, embedding2, label, margin=2.0, *, _max_tile_rows=None):
    """embedding1, embedding2: (B, D); label: (B,) or (B, 1). Returns scalar."""
    B, D = embedding1.shape
    itemsize = jnp.dtype(embedding1.dtype).itemsize
    d_lanes = ((D + 127) // 128) * 128            # lane padding of one VMEM block

    # Generation-aware VMEM budget: v7x has 64 MiB/TC, v5e/v6e have 128 MiB.
    try:
        vmem_cap = int(pltpu.get_tpu_info().vmem_capacity_bytes)
    except Exception:  # pragma: no cover - conservative fallback
        vmem_cap = 128 * 1024 * 1024
    if vmem_cap >= 100 * 1024 * 1024:             # v5e / v6e
        tile_budget = 12 * 1024 * 1024            # per-input tile
        vmem_limit = 80 * 1024 * 1024
        small_vmem = False
    else:                                          # v7x-like (64 MiB per TC)
        tile_budget = 6 * 1024 * 1024
        vmem_limit = 44 * 1024 * 1024
        small_vmem = True

    # Batch tile: byte-capped only (no row cap), multiple of 8.
    b_rounded = ((B + 7) // 8) * 8
    tb = max(8, (tile_budget // (d_lanes * itemsize)) // 8 * 8)
    tb = int(min(tb, b_rounded))
    if small_vmem and b_rounded >= 16 and tb >= b_rounded:
        # Prefer >= 2 grid tiles on v7x so the "parallel" axis spans both TCs.
        tb = max(8, ((-(-B // 2) + 7) // 8) * 8)
    if _max_tile_rows is not None:                # testing knob (multi-tile path)
        tb = int(max(8, min(tb, (_max_tile_rows // 8) * 8)))

    num_tiles = int(pl.cdiv(B, tb))
    if num_tiles == 1:
        tb = B          # single block == full array dims: always legal, no ragged rows
    padded_rows = num_tiles * tb
    mask_rows = padded_rows > B

    # Lane-dense labels: (num_tiles, 1, TB), zero-padded (only B floats total).
    y_flat = label.reshape(-1).astype(jnp.float32)
    if padded_rows > B:
        y_flat = jnp.pad(y_flat, (0, padded_rows - B))
    y3 = y_flat.reshape(num_tiles, 1, tb)

    kernel = functools.partial(
        _contrast_loss_kernel,
        margin=float(margin), tb=tb, b_valid=B, mask_rows=mask_rows)

    cost = pl.CostEstimate(
        flops=4 * B * D + 8 * B,
        transcendentals=B,
        bytes_accessed=2 * B * D * itemsize + 4 * B + num_tiles * 8 * 128 * 4)

    partials = pl.pallas_call(
        kernel,
        out_shape=jax.ShapeDtypeStruct((num_tiles * 8, 128), jnp.float32),
        grid=(num_tiles,),
        in_specs=[
            pl.BlockSpec((tb, D), lambda i: (i, 0)),
            pl.BlockSpec((tb, D), lambda i: (i, 0)),
            pl.BlockSpec((1, 1, tb), lambda i: (i, 0, 0)),
        ],
        out_specs=pl.BlockSpec((8, 128), lambda i: (i, 0)),
        compiler_params=pltpu.CompilerParams(
            dimension_semantics=("parallel",),
            vmem_limit_bytes=vmem_limit,
        ),
        cost_estimate=cost,
    )(embedding1, embedding2, y3)

    # Only element [0, 0] of each (8, 128) block is nonzero; the sum is exact.
    return jnp.sum(partials) / jnp.float32(B)


def _reference(embedding1, embedding2, label, margin=2.0):
    diff = embedding1.astype(jnp.float32) - embedding2.astype(jnp.float32) + _EPS
    d = jnp.sqrt(jnp.sum(diff * diff, axis=-1))
    y = label.reshape(-1).astype(jnp.float32)
    return jnp.mean((1.0 - y) * d**2 + y * jnp.maximum(margin - d, 0.0) ** 2)


if __name__ == "__main__":
    key = jax.random.PRNGKey(0)

    # Case 1: small aligned shape (B=8, D=32), single full-array block.
    k1, k2, k3 = jax.random.split(key, 3)
    B, D = 8, 32
    e1 = jax.random.normal(k1, (B, D), dtype=jnp.float32)
    e2 = jax.random.normal(k2, (B, D), dtype=jnp.float32)
    label = jax.random.bernoulli(k3, 0.5, (B,)).astype(jnp.float32)
    loss = contrast_loss(e1, e2, label, margin=2.0)
    jax.block_until_ready(loss)
    ref = _reference(e1, e2, label, margin=2.0)
    assert jnp.allclose(loss, ref, rtol=1e-5, atol=1e-5), (loss, ref)

    # Case 2: non-aligned shapes (B=50, D=100) — block == full array dims, no pad.
    k4, k5, k6 = jax.random.split(jax.random.PRNGKey(1), 3)
    B2, D2 = 50, 100
    f1 = jax.random.normal(k4, (B2, D2), dtype=jnp.float32)
    f2 = jax.random.normal(k5, (B2, D2), dtype=jnp.float32)
    label2 = jax.random.bernoulli(k6, 0.5, (B2,)).astype(jnp.float32)
    loss2 = contrast_loss(f1, f2, label2, margin=2.0)
    jax.block_until_ready(loss2)
    ref2 = _reference(f1, f2, label2, margin=2.0)
    assert jnp.allclose(loss2, ref2, rtol=1e-5, atol=1e-5), (loss2, ref2)

    # Case 3: force the multi-tile path (4 tiles, ragged last tile) to exercise
    # the parallel grid, row masking, and per-tile partial-sum outputs.
    loss3 = contrast_loss(f1, f2, label2, margin=2.0, _max_tile_rows=16)
    jax.block_until_ready(loss3)
    assert jnp.allclose(loss3, ref2, rtol=1e-5, atol=1e-5), (loss3, ref2)

    print("KERNEL_OK")
</pallas_src>

<mosaic_0001>
module attributes {stable_mosaic.version = 11 : i64} {
  func.func @_contrast_loss_kernel(%arg0: i32, %arg1: memref<8x32xf32, #tpu.memory_space<vmem>>, %arg2: memref<8x32xf32, #tpu.memory_space<vmem>>, %arg3: memref<1x1x8xf32, #tpu.memory_space<vmem>>, %arg4: memref<8x128xf32, #tpu.memory_space<vmem>>) attributes {dimension_semantics = [#tpu.dimension_semantics<parallel>], iteration_bounds = array<i64: 1>, scalar_prefetch = 0 : i64, scratch_operands = 0 : i64, tpu.core_type = #tpu.core_type<tc>, window_params = [{transform_indices = @transform_0, window_bounds = array<i64: 8, 32>}, {transform_indices = @transform_1, window_bounds = array<i64: 8, 32>}, {transform_indices = @transform_2, window_bounds = array<i64: 1, 1, 8>}, {transform_indices = @transform_3, window_bounds = array<i64: 8, 128>}]} {
    %c0 = arith.constant 0 : index
    %c0_0 = arith.constant 0 : index
    %0 = vector.load %arg1[%c0, %c0_0] : memref<8x32xf32, #tpu.memory_space<vmem>>, vector<8x32xf32>
    %c0_1 = arith.constant 0 : index
    %c0_2 = arith.constant 0 : index
    %1 = vector.load %arg2[%c0_1, %c0_2] : memref<8x32xf32, #tpu.memory_space<vmem>>, vector<8x32xf32>
    %c0_3 = arith.constant 0 : index
    %c0_4 = arith.constant 0 : index
    %c0_5 = arith.constant 0 : index
    %2 = vector.load %arg3[%c0_3, %c0_4, %c0_5] : memref<1x1x8xf32, #tpu.memory_space<vmem>>, vector<1x1x8xf32>
    %3 = vector.shape_cast %2 : vector<1x1x8xf32> to vector<1x8xf32>
    %4 = arith.subf %0, %1 : vector<8x32xf32>
    %cst = arith.constant 9.99999997E-7 : f32
    %5 = vector.broadcast %cst : f32 to vector<8x32xf32>
    %6 = arith.addf %4, %5 : vector<8x32xf32>
    %7 = arith.mulf %6, %6 : vector<8x32xf32>
    %cst_6 = arith.constant dense<0.000000e+00> : vector<8xf32>
    %8 = vector.multi_reduction <add>, %7, %cst_6 [1] : vector<8x32xf32> to vector<8xf32>
    %9 = vector.shape_cast %8 : vector<8xf32> to vector<8x1xf32>
    %10 = math.sqrt %9 : vector<8x1xf32>
    %cst_7 = arith.constant 2.000000e+00 : f32
    %11 = vector.broadcast %cst_7 : f32 to vector<8x1xf32>
    %12 = arith.subf %11, %10 : vector<8x1xf32>
    %cst_8 = arith.constant 0.000000e+00 : f32
    %13 = vector.broadcast %cst_8 : f32 to vector<8x1xf32>
    %14 = arith.maximumf %12, %13 : vector<8x1xf32>
    %15 = arith.mulf %14, %14 : vector<8x1xf32>
    %16 = arith.subf %15, %9 : vector<8x1xf32>
    %17 = vector.shape_cast %9 : vector<8x1xf32> to vector<1x8x1xf32>
    %cst_9 = arith.constant dense<0.000000e+00> : vector<1xf32>
    %18 = vector.multi_reduction <add>, %17, %cst_9 [1, 2] : vector<1x8x1xf32> to vector<1xf32>
    %19 = vector.shape_cast %18 : vector<1xf32> to vector<1x1x1xf32>
    %20 = vector.extract %19[0, 0, 0] : f32 from vector<1x1x1xf32>
    %cst_10 = arith.constant dense<0.000000e+00> : vector<1x1xf32>
    %21 = tpu.matmul %3, %16, %cst_10 {dimension_numbers = #tpu.dot_dimension_numbers<[1], [0], [0], [1], [0, 0, 1, 1], [], []>} : vector<1x8xf32>, vector<8x1xf32>, vector<1x1xf32> -> vector<1x1xf32>
    %22 = vector.shape_cast %21 : vector<1x1xf32> to vector<1x1x1xf32>
    %cst_11 = arith.constant dense<0.000000e+00> : vector<1xf32>
    %23 = vector.multi_reduction <add>, %22, %cst_11 [1, 2] : vector<1x1x1xf32> to vector<1xf32>
    %24 = vector.shape_cast %23 : vector<1xf32> to vector<1x1x1xf32>
    %25 = vector.extract %24[0, 0, 0] : f32 from vector<1x1x1xf32>
    %26 = arith.addf %20, %25 : f32
    %27 = tpu.iota {dimensions = array<i32: 0>} : vector<8x128xi32>
    %28 = tpu.iota {dimensions = array<i32: 1>} : vector<8x128xi32>
    %c0_i32 = arith.constant 0 : i32
    %29 = vector.broadcast %c0_i32 : i32 to vector<8x128xi32>
    %30 = arith.cmpi eq, %27, %29 : vector<8x128xi32>
    %c0_i32_12 = arith.constant 0 : i32
    %31 = vector.broadcast %c0_i32_12 : i32 to vector<8x128xi32>
    %32 = arith.cmpi eq, %28, %31 : vector<8x128xi32>
    %33 = arith.andi %30, %32 : vector<8x128xi1>
    %cst_13 = arith.constant 0.000000e+00 : f32
    %34 = vector.broadcast %26 : f32 to vector<8x128xf32>
    %35 = vector.broadcast %cst_13 : f32 to vector<8x128xf32>
    %36 = arith.select %33, %34, %35 : vector<8x128xi1>, vector<8x128xf32>
    %c0_14 = arith.constant 0 : index
    %c0_15 = arith.constant 0 : index
    %37 = vector.load %arg4[%c0_14, %c0_15] : memref<8x128xf32, #tpu.memory_space<vmem>>, vector<8x128xf32>
    tpu.vector_store %arg4[%c0_14, %c0_15], %36 {strides = array<i32>} : memref<8x128xf32, #tpu.memory_space<vmem>>, vector<8x128xf32>,
    return
  }
  func.func @transform_0(%arg0: i32) -> (i32, i32) {
    %c0_i32 = arith.constant 0 : i32
    %c0_i32_0 = arith.constant 0 : i32
    return %arg0, %c0_i32 : i32, i32
  }
  func.func @transform_1(%arg0: i32) -> (i32, i32) {
    %c0_i32 = arith.constant 0 : i32
    %c0_i32_0 = arith.constant 0 : i32
    return %arg0, %c0_i32 : i32, i32
  }
  func.func @transform_2(%arg0: i32) -> (i32, i32, i32) {
    %c0_i32 = arith.constant 0 : i32
    %c0_i32_0 = arith.constant 0 : i32
    %c0_i32_1 = arith.constant 0 : i32
    return %arg0, %c0_i32, %c0_i32_0 : i32, i32, i32
  }
  func.func @transform_3(%arg0: i32) -> (i32, i32) {
    %c0_i32 = arith.constant 0 : i32
    %c0_i32_0 = arith.constant 0 : i32
    return %arg0, %c0_i32 : i32, i32
  }
}

</mosaic_0001>

<llo_original>
// kernel: tpu_custom_call.1
$region0: #{tpu_custom_call.1}
  #allocation0 [shape = 'u32[]', space=smem, size = 0x4, offset = 0x4, fixed_abs, tag = 'smem constant byte address 0x4 - core index']
  #allocation1 [shape = 'u32[144,128]{1,0:T(1,128)}', space=vmem, size = 0x12000, scoped, tag = 'internal scratch']
  %s0 = inlined_call_operand.hbm [shape: f32[8,32], index: 0, kind: input, shape index: {}]
  %s1 = inlined_call_operand.hbm [shape: f32[8,32], index: 1, kind: input, shape index: {}]
  %s2 = inlined_call_operand.vmem [shape: f32[1,1,8], index: 2, kind: input, shape index: {}]
  %s3 = inlined_call_operand.hbm [shape: f32[8,128], index: 3, kind: output, shape index: {}]
  %s4 = sld [smem:[#allocation0]]
  $region30: #{tpu_custom_call.1} parent=0
    _
  %s6 = ssub.s32 1, %s4
  %s7 = scalar_select 0, %s6, %s4
  $region1: #{tpu_custom_call.1} parent=0
    #allocation2 [shape = 'u8[4096]{0}', space=vmem, size = 0x1000, scoped, tag = 'input window, operand 0, single buffered']
    #allocation3 [shape = 's32[1]{0}', space=sflag, size = 0x4, scoped, tag = 'scoped memory for tpu_custom_call.1']
    #allocation4 [shape = 's32[1]{0}', space=sflag, size = 0x4, scoped, tag = 'scoped memory for tpu_custom_call.1']
    #allocation5 [shape = 'u8[4096]{0}', space=vmem, size = 0x1000, scoped, tag = 'input window, operand 1, single buffered']
    #allocation6 [shape = 's32[1]{0}', space=sflag, size = 0x4, scoped, tag = 'scoped memory for tpu_custom_call.1']
    #allocation7 [shape = 'u8[4096]{0}', space=vmem, size = 0x1000, scoped, tag = 'output window, operand 0, single buffered']
    %8 = vsyncpa [#allocation3], 0
    %9 = vsyncpa [#allocation6], 0
    %10 = vsyncpa [#allocation4], 0
    // Predicated region
    $region2: #{tpu_custom_call.1} parent=1 // pred_check
      _
    $region3: #{tpu_custom_call.1} parent=1 // pred_check_branch
      %12 = sbr.rel (0) target = $region5
    $region4: #{tpu_custom_call.1} parent=1 // pred_region
      %s14 = ssub.s32 128, 128
      %15 = vsyncadd [#allocation3], %s14
      %s17 = sshll.u32 [#allocation2], 4
      %s18 = int_to_ptr.vmem [resolvable:$true] %s17
      %20 = dma.hbm_to_vmem [thread:$0]  %s0, 128, %s18, [#allocation3]
    $region5: #{tpu_custom_call.1} parent=1 // pred_fallthru
      _
    // Predicated region
    $region6: #{tpu_custom_call.1} parent=1 // pred_check
      _
    $region7: #{tpu_custom_call.1} parent=1 // pred_check_branch
      %22 = sbr.rel (0) target = $region9
    $region8: #{tpu_custom_call.1} parent=1 // pred_region
      %s24 = ssub.s32 128, 128
      %25 = vsyncadd [#allocation6], %s24
      %s27 = sshll.u32 [#allocation5], 4
      %s28 = int_to_ptr.vmem [resolvable:$true] %s27
      %30 = dma.hbm_to_vmem [thread:$0]  %s1, 128, %s28, [#allocation6]
    $region9: #{tpu_custom_call.1} parent=1 // pred_fallthru
      _
    // Predicated region
    $region10: #{tpu_custom_call.1} parent=1 // pred_check
      _
    $region11: #{tpu_custom_call.1} parent=1 // pred_check_branch
      %32 = sbr.rel (0) target = $region13
    $region12: #{tpu_custom_call.1} parent=1 // pred_region
      _
    $region13: #{tpu_custom_call.1} parent=1 // pred_fallthru
      _
    // Predicated region
    $region14: #{tpu_custom_call.1} parent=1 // pred_check
      _
    $region15: #{tpu_custom_call.1} parent=1 // pred_check_branch
      %34 = sbr.rel (0) target = $region17
    $region16: #{tpu_custom_call.1} parent=1 // pred_region
      %35 = dma.done [#allocation3], 128
    $region17: #{tpu_custom_call.1} parent=1 // pred_fallthru
      _
    // Predicated region
    $region18: #{tpu_custom_call.1} parent=1 // pred_check
      _
    $region19: #{tpu_custom_call.1} parent=1 // pred_check_branch
      %37 = sbr.rel (0) target = $region21
    $region20: #{tpu_custom_call.1} parent=1 // pred_region
      %38 = dma.done [#allocation6], 128
    $region21: #{tpu_custom_call.1} parent=1 // pred_fallthru
      _
    %v39 = vld [vmem:[#allocation2] sm:$0xff]
    %v40 = vld [vmem:[#allocation5] sm:$0xff]
    %v41 = vld [vmem:[%s2] sm:$0x1]
    %v42 = vsub.f32 %v39, %v40
    %v43 = vadd.f32 %v42, 1e-06
    %v44 = vmul.f32 %v43, %v43
    %vm45 = vcmask 261120
    %v46 = vsel %vm45, %v44, 0.0
    %47 = vadd.xlane.f32.xlu0 %v46
    %v48 = vpop.xlane.xlu0 %47
    %v49 = vrsqrt.pop %v48
    %v50 = vmul.f32 %v48, %v49
    %vm51 = vcmp.eq.f32.partialorder %v48, inf
    %v52 = vsel %vm51, %v48, %v50
    %vm53 = vcmp.eq.f32.partialorder %v48, 0.0
    %v54 = vand.u32 %v48, 2147483648
    %v55 = vsel %vm53, %v54, %v52
    %v56 = vsub.f32 2.0, %v55
    %v57 = vmax.f32 %v56, 0.0
    %v58 = vmul.f32 %v57, %v57
    %v59 = vsub.f32 %v58, %v48
    %vm60 = vcmask 7168
    %v61 = vsel %vm60, %v48, 0.0
    %62 = vadd.xlane.f32.xlu0 %v61
    %v63 = vpop.xlane.xlu0 %62
    %v64 = vrot.slane %v63, 4
    %v65 = vadd.f32 %v63, %v64
    %v66 = vrot.slane %v65, 2
    %v67 = vadd.f32 %v65, %v66
    %v68 = vrot.slane %v67, 1
    %v69 = vadd.f32 %v67, %v68
    %s70 = vtos %v69
    %vm71 = vcmask 64512
    %v73 = vsel %vm71, %v41, 0
    %75 = vmatprep.subr.mxu0 0.0
    %76 = vmatpush1.msra.mxu0 0.0
    %77 = vmatprep.subr.mxu0 0.0
    %78 = vmatpush1.msra.mxu0 0.0
    %79 = vmatprep.subr.mxu0 0.0
    %80 = vmatpush1.msra.mxu0 0.0
    %81 = vmatprep.subr.mxu0 0.0
    %82 = vmatpush1.msra.mxu0 0.0
    %83 = vmatprep.subr.mxu0 0.0
    %84 = vmatpush1.msra.mxu0 0.0
    %85 = vmatprep.subr.mxu0 0.0
    %86 = vmatpush1.msra.mxu0 0.0
    %87 = vmatprep.subr.mxu0 0.0
    %88 = vmatpush1.msra.mxu0 0.0
    %89 = vmatprep.subr.mxu0 0.0
    %90 = vmatpush1.msra.mxu0 0.0
    %91 = vmatprep.subr.mxu0 0.0
    %92 = vmatpush1.msra.mxu0 0.0
    %93 = vmatprep.subr.mxu0 0.0
    %94 = vmatpush1.msra.mxu0 0.0
    %95 = vmatprep.subr.mxu0 0.0
    %96 = vmatpush1.msra.mxu0 0.0
    %97 = vmatprep.subr.mxu0 0.0
    %98 = vmatpush1.msra.mxu0 0.0
    %99 = vmatprep.subr.mxu0 0.0
    %100 = vmatpush1.msra.mxu0 0.0
    %101 = vmatprep.subr.mxu0 0.0
    %102 = vmatpush1.msra.mxu0 0.0
    %103 = vmatprep.subr.mxu0 0.0
    %104 = vmatpush1.msra.mxu0 0.0
    %105 = vmatprep.subr.mxu0 0.0
    %106 = vmatpush1.msra.mxu0 %v59
    %107 = vmatprep.subr.mxu0 0.0
    %108 = vmatpush2.msra.mxu0 0.0
    %109 = vmatprep.subr.mxu0 0.0
    %110 = vmatpush2.msra.mxu0 0.0
    %111 = vmatprep.subr.mxu0 0.0
    %112 = vmatpush2.msra.mxu0 0.0
    %113 = vmatprep.subr.mxu0 0.0
    %114 = vmatpush2.msra.mxu0 0.0
    %115 = vmatprep.subr.mxu0 0.0
    %116 = vmatpush2.msra.mxu0 0.0
    %117 = vmatprep.subr.mxu0 0.0
    %118 = vmatpush2.msra.mxu0 0.0
    %119 = vmatprep.subr.mxu0 0.0
    %120 = vmatpush2.msra.mxu0 0.0
    %121 = vmatprep.subr.mxu0 0.0
    %122 = vmatpush2.msra.mxu0 0.0
    %123 = vmatprep.subr.mxu0 0.0
    %124 = vmatpush2.msra.mxu0 0.0
    %125 = vmatprep.subr.mxu0 0.0
    %126 = vmatpush2.msra.mxu0 0.0
    %127 = vmatprep.subr.mxu0 0.0
    %128 = vmatpush2.msra.mxu0 0.0
    %129 = vmatprep.subr.mxu0 0.0
    %130 = vmatpush2.msra.mxu0 0.0
    %131 = vmatprep.subr.mxu0 0.0
    %132 = vmatpush2.msra.mxu0 0.0
    %133 = vmatprep.subr.mxu0 0.0
    %134 = vmatpush2.msra.mxu0 0.0
    %135 = vmatprep.subr.mxu0 0.0
    %136 = vmatpush2.msra.mxu0 0.0
    %137 = vmatprep.subr.mxu0 0.0
    %138 = vmatpush2.msra.mxu0 0.0
    %139 = vmatprep.mubr.f32.mxu0 0.0
    %140 = vmatmul.mubr.f32.gmra.mxu0 %v73
    %v141 = vpop.f32.mrf.mxu0
    %v142 = vadd.f32 0.0, %v141
    %v143 = vpop.f32.mrf.mxu0
    %144 = vdwg.mxu0
    %v145 = vadd.f32 %v142, 0.0
    %s146 = vtos %v145
    %s147 = sadd.f32 %s70, %s146
    %v148 = vlaneseq
    %v149 = vshrl.u32 %v148, 7
    %v150 = vlaneseq
    %v151 = vand.u32 %v150, 127
    %vm152 = vcmp.eq.s32.totalorder %v149, 0
    %vm153 = vcmp.eq.s32.totalorder %v151, 0
    %vm154 = vmand %vm152, %vm153
    %v155 = vstv %s147
    %v156 = vsel %vm154, %v155, 0.0
    %157 = vst [vmem:[#allocation7] sm:$0xff] %v156
    // Predicated region
    $region22: #{tpu_custom_call.1} parent=1 // pred_check
      _
    $region23: #{tpu_custom_call.1} parent=1 // pred_check_branch
      %159 = sbr.rel (0) target = $region25
    $region24: #{tpu_custom_call.1} parent=1 // pred_region
      %s161 = ssub.s32 128, 128
      %162 = vsyncadd [#allocation4], %s161
      %s164 = sshll.u32 [#allocation7], 4
      %s165 = int_to_ptr.vmem [resolvable:$true] %s164
      %167 = dma.vmem_to_hbm [thread:$0]  %s165, 128, %s3, [#allocation4]
    $region25: #{tpu_custom_call.1} parent=1 // pred_fallthru
      _
    // Predicated region
    $region26: #{tpu_custom_call.1} parent=1 // pred_check
      _
    $region27: #{tpu_custom_call.1} parent=1 // pred_check_branch
      %169 = sbr.rel (0) target = $region29
    $region28: #{tpu_custom_call.1} parent=1 // pred_region
      %170 = dma.done [#allocation4], 128
    $region29: #{tpu_custom_call.1} parent=1 // pred_fallthru
      _
    %171 = vsyncpa [#allocation3], 1
    %172 = vsyncpa [#allocation6], 1
    %173 = vsyncpa [#allocation4], 1

</llo_original>
